<compile_context>
chip_gen: v7x
topology: tpu7x:2x2x1
jax: 0.10.0
libtpu: 0.0.40
codegen_flags: <defaults>
</compile_context>

<pallas_src>
import jax
import jax.numpy as jnp
from jax.experimental import pallas as pl
from jax.experimental.pallas import tpu as pltpu


def _round_up(a, b):
    return ((a + b - 1) // b) * b


def _cdiv(a, b):
    return (a + b - 1) // b


def _cdf_kernel(x_ref, w1_ref, b1_ref, w2_ref, b2_ref, w3_ref, b3_ref, o_ref):
    # x tile: (TILE_B, n_in) f32.  Weights bf16 in PyTorch (out, in) layout.
    # Biases f32, shape (out, 1).  Output o_ref: (n_keep, TILE_B) f32 -- batch
    # occupies the lane axis everywhere downstream of the first matmul.
    x = x_ref[...].astype(jnp.bfloat16)

    dn_nt = (((1,), (1,)), ((), ()))   # contract both last dims  -> (out, TILE_B)
    dn_nn = (((1,), (0,)), ((), ()))   # standard matmul          -> (out, TILE_B)

    # MLP: bf16 MXU operands, f32 accumulation, f32 tanh (VPU/EUP).
    h1 = jnp.tanh(
        jax.lax.dot_general(w1_ref[...], x, dn_nt,
                            preferred_element_type=jnp.float32) + b1_ref[...])
    h2 = jnp.tanh(
        jax.lax.dot_general(w2_ref[...], h1.astype(jnp.bfloat16), dn_nn,
                            preferred_element_type=jnp.float32) + b2_ref[...])
    logits = (jax.lax.dot_general(w3_ref[...], h2.astype(jnp.bfloat16), dn_nn,
                                  preferred_element_type=jnp.float32)
              + b3_ref[...])                                   # (K, TILE_B)

    # Numerically-stable softmax numerator; max is a sublane reduction over
    # the K(=9) rows (2 sublane tiles), fully lane-occupied.
    m = jnp.max(logits, axis=0, keepdims=True)                 # (1, TILE_B)
    e = jnp.exp(logits - m)                                    # (K, TILE_B)

    # Truncated cumsum along sublanes as K-1 shifted f32 adds (unrolled,
    # static slices).  The total after all K rows is the softmax denominator,
    # so no separate sum reduction is needed, and the kept CDF columns are
    # exactly nondecreasing and <= denom.
    k = e.shape[0]
    n_keep = o_ref.shape[0]            # == k - 1 for this module
    acc = e[0:1, :]
    rows = [acc]
    for i in range(1, k):
        acc = acc + e[i:i + 1, :]
        rows.append(acc)
    denom = rows[-1]                                           # (1, TILE_B)
    ecum = jnp.concatenate(rows[:n_keep], axis=0)              # (n_keep, TILE_B)

    inv = pl.reciprocal(denom, approx=False)                   # (1, TILE_B), cheap
    o_ref[...] = (ecum * inv).astype(o_ref.dtype)


def _choose_tile_b(batch, *, lane=128, max_tile=512):
    """Lane-aligned batch tile: >=2 grid steps for larger batches (v7x 2-TC),
    small padding waste, per-step compute amortizes the ~0.35us step cost."""
    if batch <= lane:
        return _round_up(batch, 8)
    steps = max(2, _cdiv(batch, max_tile))
    return _round_up(_cdiv(batch, steps), lane)


def softmax_cdf_forward(x, params, *, n_output, msd_nonzero=False,
                        max_tile_b=512):
    """x: (batch, n_dim_input) float32.  Weights in PyTorch (out, in) layout."""
    w1, b1, w2, b2, w3, b3 = params
    batch, n_in = x.shape
    n_hidden = w1.shape[0]
    n_out_softmax = w3.shape[0]            # K
    n_keep = n_out_softmax - 1             # columns kept after cumsum truncation

    tile_b = _choose_tile_b(batch, max_tile=max_tile_b)
    padded = _round_up(batch, tile_b)
    if padded != batch:
        x = jnp.pad(x, ((0, padded - batch), (0, 0)))
    grid = (padded // tile_b,)

    # Pre-cast weights to bf16 (halves resident bytes + single MXU pass);
    # biases stay f32, reshaped to (out, 1) to broadcast over lanes.
    w1b = w1.astype(jnp.bfloat16)
    w2b = w2.astype(jnp.bfloat16)
    w3b = w3.astype(jnp.bfloat16)
    b1c = b1.reshape(-1, 1).astype(jnp.float32)
    b2c = b2.reshape(-1, 1).astype(jnp.float32)
    b3c = b3.reshape(-1, 1).astype(jnp.float32)

    cost = pl.CostEstimate(
        flops=2 * padded * (n_in * n_hidden + n_hidden * n_hidden
                            + n_hidden * n_out_softmax)
              + padded * (n_out_softmax - 1),
        transcendentals=padded * (2 * n_hidden + n_out_softmax + 1),
        bytes_accessed=(padded * (n_in + n_keep) * 4
                        + (w1b.size + w2b.size + w3b.size) * 2
                        + (b1c.size + b2c.size + b3c.size) * 4),
    )

    grid_spec = pltpu.PrefetchScalarGridSpec(
        num_scalar_prefetch=0,
        grid=grid,
        in_specs=[
            pl.BlockSpec((tile_b, n_in), lambda i: (i, 0)),     # x tile
            pl.BlockSpec(w1b.shape, lambda i: (0, 0)),          # resident weights
            pl.BlockSpec(b1c.shape, lambda i: (0, 0)),
            pl.BlockSpec(w2b.shape, lambda i: (0, 0)),
            pl.BlockSpec(b2c.shape, lambda i: (0, 0)),
            pl.BlockSpec(w3b.shape, lambda i: (0, 0)),
            pl.BlockSpec(b3c.shape, lambda i: (0, 0)),
        ],
        # Lane-dense output: batch on the lane axis.
        out_specs=pl.BlockSpec((n_keep, tile_b), lambda i: (0, i)),
    )

    out = pl.pallas_call(
        _cdf_kernel,
        out_shape=jax.ShapeDtypeStruct((n_keep, padded), jnp.float32),
        grid_spec=grid_spec,
        compiler_params=pltpu.CompilerParams(
            dimension_semantics=("parallel",)),
        cost_estimate=cost,
    )(x, w1b, b1c, w2b, b2c, w3b, b3c)

    probs = out[:, :batch].T               # (batch, n_keep)

    if msd_nonzero:
        pad = jnp.full((batch, 1), 1e-6, dtype=probs.dtype)
        probs = jnp.concatenate([pad, probs], axis=-1)
    return probs


def init_params(key, n_dim_input, n_output, n_dim_hidden=None, n_mlp_layer=3,
                msd_nonzero=False):
    """Deterministic init mimicking nn.Linear defaults (uniform +/- 1/sqrt(fan_in)).
    Weights are returned in PyTorch layout: (out_features, in_features)."""
    if n_dim_hidden is None:
        n_dim_hidden = int(n_output * n_dim_input // 2)
    n_out_softmax = n_output if msd_nonzero else n_output + 1

    dims = []
    for idx in range(n_mlp_layer):
        n_in = n_dim_input if idx == 0 else n_dim_hidden
        n_out = n_out_softmax if idx == n_mlp_layer - 1 else n_dim_hidden
        dims.append((n_in, n_out))

    params = []
    for (n_in, n_out) in dims:
        key, kw, kb = jax.random.split(key, 3)
        bound = 1.0 / jnp.sqrt(jnp.float32(n_in))
        w = jax.random.uniform(kw, (n_out, n_in), jnp.float32, -bound, bound)
        b = jax.random.uniform(kb, (n_out,), jnp.float32, -bound, bound)
        params.extend([w, b])
    return tuple(params)


def _reference_forward(x, params, *, n_output, msd_nonzero=False):
    """Pure-JAX f32 reference of the PyTorch forward (weights are (out, in))."""
    w1, b1, w2, b2, w3, b3 = params
    z = jnp.tanh(x @ w1.T + b1)
    z = jnp.tanh(z @ w2.T + b2)
    z = z @ w3.T + b3
    p = jax.nn.softmax(z, axis=-1)
    probs = jnp.cumsum(p, axis=-1)[:, :z.shape[-1] - 1]
    if msd_nonzero:
        pad = jnp.full((x.shape[0], 1), 1e-6, dtype=probs.dtype)
        probs = jnp.concatenate([pad, probs], axis=-1)
    return probs


if __name__ == "__main__":
    # Shapes consistent with the module: n_dim_input=16, n_output=8
    # -> hidden = 8*16//2 = 64, n_output_softmax = 9, output (batch, 8).
    n_dim_input, n_output = 16, 8
    msd_nonzero = False   # default path of the PyTorch module

    key = jax.random.PRNGKey(0)
    key, kparams = jax.random.split(key)
    params = init_params(kparams, n_dim_input, n_output,
                         n_mlp_layer=3, msd_nonzero=msd_nonzero)

    ok = True
    for batch in (8, 300):   # single-tile path and padded multi-step path
        key, kx = jax.random.split(key)
        x = jax.random.normal(kx, (batch, n_dim_input), dtype=jnp.float32)

        out = softmax_cdf_forward(x, params, n_output=n_output,
                                  msd_nonzero=msd_nonzero)
        out = jax.block_until_ready(out)

        ref = _reference_forward(x, params, n_output=n_output,
                                 msd_nonzero=msd_nonzero)
        assert out.shape == (batch, n_output), out.shape
        # bf16 MXU operands vs. pure-f32 reference: relaxed tolerance
        # (probs are in [0, 1]).
        close = bool(jnp.allclose(out, ref, atol=5e-3, rtol=1e-2))
        if not close:
            ok = False
            print("MISMATCH batch=%d max_abs_err=%g"
                  % (batch, float(jnp.max(jnp.abs(out - ref)))))

    if ok:
        print("KERNEL_OK")
</pallas_src>

<mosaic_0001>
module attributes {stable_mosaic.version = 11 : i64} {
  func.func @_cdf_kernel(%arg0: i32, %arg1: memref<8x16xf32, #tpu.memory_space<vmem>>, %arg2: memref<64x16xbf16, #tpu.memory_space<vmem>>, %arg3: memref<64x1xf32, #tpu.memory_space<vmem>>, %arg4: memref<64x64xbf16, #tpu.memory_space<vmem>>, %arg5: memref<64x1xf32, #tpu.memory_space<vmem>>, %arg6: memref<9x64xbf16, #tpu.memory_space<vmem>>, %arg7: memref<9x1xf32, #tpu.memory_space<vmem>>, %arg8: memref<8x8xf32, #tpu.memory_space<vmem>>) attributes {dimension_semantics = [#tpu.dimension_semantics<parallel>], iteration_bounds = array<i64: 1>, scalar_prefetch = 0 : i64, scratch_operands = 0 : i64, tpu.core_type = #tpu.core_type<tc>, window_params = [{transform_indices = @transform_0, window_bounds = array<i64: 8, 16>}, {pipeline_mode = #tpu.pipeline_mode<synchronous>, transform_indices = @transform_1, window_bounds = array<i64: 64, 16>}, {pipeline_mode = #tpu.pipeline_mode<synchronous>, transform_indices = @transform_2, window_bounds = array<i64: 64, 1>}, {pipeline_mode = #tpu.pipeline_mode<synchronous>, transform_indices = @transform_3, window_bounds = array<i64: 64, 64>}, {pipeline_mode = #tpu.pipeline_mode<synchronous>, transform_indices = @transform_4, window_bounds = array<i64: 64, 1>}, {pipeline_mode = #tpu.pipeline_mode<synchronous>, transform_indices = @transform_5, window_bounds = array<i64: 9, 64>}, {pipeline_mode = #tpu.pipeline_mode<synchronous>, transform_indices = @transform_6, window_bounds = array<i64: 9, 1>}, {transform_indices = @transform_7, window_bounds = array<i64: 8, 8>}]} {
    %c0 = arith.constant 0 : index
    %c0_0 = arith.constant 0 : index
    %0 = vector.load %arg1[%c0, %c0_0] : memref<8x16xf32, #tpu.memory_space<vmem>>, vector<8x16xf32>
    %1 = arith.truncf %0 : vector<8x16xf32> to vector<8x16xbf16>
    %c0_1 = arith.constant 0 : index
    %c0_2 = arith.constant 0 : index
    %2 = vector.load %arg2[%c0_1, %c0_2] : memref<64x16xbf16, #tpu.memory_space<vmem>>, vector<64x16xbf16>
    %cst = arith.constant dense<0.000000e+00> : vector<64x8xf32>
    %3 = tpu.matmul %2, %1, %cst {dimension_numbers = #tpu.dot_dimension_numbers<[1], [1], [0], [0], [0, 0, 1, 0], [], []>} : vector<64x16xbf16>, vector<8x16xbf16>, vector<64x8xf32> -> vector<64x8xf32>
    %c0_3 = arith.constant 0 : index
    %c0_4 = arith.constant 0 : index
    %4 = vector.load %arg3[%c0_3, %c0_4] : memref<64x1xf32, #tpu.memory_space<vmem>>, vector<64x1xf32>
    %5 = vector.broadcast %4 : vector<64x1xf32> to vector<64x8xf32>
    %6 = arith.addf %3, %5 : vector<64x8xf32>
    %7 = math.tanh %6 : vector<64x8xf32>
    %c0_5 = arith.constant 0 : index
    %c0_6 = arith.constant 0 : index
    %8 = vector.load %arg4[%c0_5, %c0_6] : memref<64x64xbf16, #tpu.memory_space<vmem>>, vector<64x64xbf16>
    %9 = arith.truncf %7 : vector<64x8xf32> to vector<64x8xbf16>
    %cst_7 = arith.constant dense<0.000000e+00> : vector<64x8xf32>
    %10 = tpu.matmul %8, %9, %cst_7 {dimension_numbers = #tpu.dot_dimension_numbers<[1], [0], [0], [1], [0, 0, 1, 1], [], []>} : vector<64x64xbf16>, vector<64x8xbf16>, vector<64x8xf32> -> vector<64x8xf32>
    %c0_8 = arith.constant 0 : index
    %c0_9 = arith.constant 0 : index
    %11 = vector.load %arg5[%c0_8, %c0_9] : memref<64x1xf32, #tpu.memory_space<vmem>>, vector<64x1xf32>
    %12 = vector.broadcast %11 : vector<64x1xf32> to vector<64x8xf32>
    %13 = arith.addf %10, %12 : vector<64x8xf32>
    %14 = math.tanh %13 : vector<64x8xf32>
    %c0_10 = arith.constant 0 : index
    %c0_11 = arith.constant 0 : index
    %15 = vector.load %arg6[%c0_10, %c0_11] : memref<9x64xbf16, #tpu.memory_space<vmem>>, vector<9x64xbf16>
    %16 = arith.truncf %14 : vector<64x8xf32> to vector<64x8xbf16>
    %cst_12 = arith.constant dense<0.000000e+00> : vector<9x8xf32>
    %17 = tpu.matmul %15, %16, %cst_12 {dimension_numbers = #tpu.dot_dimension_numbers<[1], [0], [0], [1], [0, 0, 1, 1], [], []>} : vector<9x64xbf16>, vector<64x8xbf16>, vector<9x8xf32> -> vector<9x8xf32>
    %c0_13 = arith.constant 0 : index
    %c0_14 = arith.constant 0 : index
    %18 = vector.load %arg7[%c0_13, %c0_14] : memref<9x1xf32, #tpu.memory_space<vmem>>, vector<9x1xf32>
    %19 = vector.broadcast %18 : vector<9x1xf32> to vector<9x8xf32>
    %20 = arith.addf %17, %19 : vector<9x8xf32>
    %cst_15 = arith.constant dense<0xFF800000> : vector<8xf32>
    %21 = vector.multi_reduction <maximumf>, %20, %cst_15 [0] : vector<9x8xf32> to vector<8xf32>
    %22 = vector.shape_cast %21 : vector<8xf32> to vector<1x8xf32>
    %23 = vector.broadcast %22 : vector<1x8xf32> to vector<9x8xf32>
    %24 = arith.subf %20, %23 : vector<9x8xf32>
    %25 = math.exp %24 : vector<9x8xf32>
    %26 = vector.extract_strided_slice %25 {offsets = [0, 0], sizes = [1, 8], strides = [1, 1]} : vector<9x8xf32> to vector<1x8xf32>
    %27 = vector.extract_strided_slice %25 {offsets = [1, 0], sizes = [1, 8], strides = [1, 1]} : vector<9x8xf32> to vector<1x8xf32>
    %28 = arith.addf %26, %27 : vector<1x8xf32>
    %29 = vector.extract_strided_slice %25 {offsets = [2, 0], sizes = [1, 8], strides = [1, 1]} : vector<9x8xf32> to vector<1x8xf32>
    %30 = arith.addf %28, %29 : vector<1x8xf32>
    %31 = vector.extract_strided_slice %25 {offsets = [3, 0], sizes = [1, 8], strides = [1, 1]} : vector<9x8xf32> to vector<1x8xf32>
    %32 = arith.addf %30, %31 : vector<1x8xf32>
    %33 = vector.extract_strided_slice %25 {offsets = [4, 0], sizes = [1, 8], strides = [1, 1]} : vector<9x8xf32> to vector<1x8xf32>
    %34 = arith.addf %32, %33 : vector<1x8xf32>
    %35 = vector.extract_strided_slice %25 {offsets = [5, 0], sizes = [1, 8], strides = [1, 1]} : vector<9x8xf32> to vector<1x8xf32>
    %36 = arith.addf %34, %35 : vector<1x8xf32>
    %37 = vector.extract_strided_slice %25 {offsets = [6, 0], sizes = [1, 8], strides = [1, 1]} : vector<9x8xf32> to vector<1x8xf32>
    %38 = arith.addf %36, %37 : vector<1x8xf32>
    %39 = vector.extract_strided_slice %25 {offsets = [7, 0], sizes = [1, 8], strides = [1, 1]} : vector<9x8xf32> to vector<1x8xf32>
    %40 = arith.addf %38, %39 : vector<1x8xf32>
    %41 = vector.extract_strided_slice %25 {offsets = [8, 0], sizes = [1, 8], strides = [1, 1]} : vector<9x8xf32> to vector<1x8xf32>
    %42 = arith.addf %40, %41 : vector<1x8xf32>
    %43 = tpu.concatenate %26, %28, %30, %32, %34, %36, %38, %40 in 0 : vector<1x8xf32>, vector<1x8xf32>, vector<1x8xf32>, vector<1x8xf32>, vector<1x8xf32>, vector<1x8xf32>, vector<1x8xf32>, vector<1x8xf32> -> vector<8x8xf32>
    %44 = tpu.reciprocal %42 : vector<1x8xf32> -> vector<1x8xf32>
    %45 = vector.broadcast %44 : vector<1x8xf32> to vector<8x8xf32>
    %46 = arith.mulf %43, %45 : vector<8x8xf32>
    %c0_16 = arith.constant 0 : index
    %c0_17 = arith.constant 0 : index
    %47 = vector.load %arg8[%c0_16, %c0_17] : memref<8x8xf32, #tpu.memory_space<vmem>>, vector<8x8xf32>
    tpu.vector_store %arg8[%c0_16, %c0_17], %46 {strides = array<i32>} : memref<8x8xf32, #tpu.memory_space<vmem>>, vector<8x8xf32>,
    return
  }
  func.func @transform_0(%arg0: i32) -> (i32, i32) {
    %c0_i32 = arith.constant 0 : i32
    %c0_i32_0 = arith.constant 0 : i32
    return %arg0, %c0_i32 : i32, i32
  }
  func.func @transform_1(%arg0: i32) -> (i32, i32) {
    %c0_i32 = arith.constant 0 : i32
    %c0_i32_0 = arith.constant 0 : i32
    %c0_i32_1 = arith.constant 0 : i32
    return %c0_i32, %c0_i32_0 : i32, i32
  }
  func.func @transform_2(%arg0: i32) -> (i32, i32) {
    %c0_i32 = arith.constant 0 : i32
    %c0_i32_0 = arith.constant 0 : i32
    %c0_i32_1 = arith.constant 0 : i32
    return %c0_i32, %c0_i32_0 : i32, i32
  }
  func.func @transform_3(%arg0: i32) -> (i32, i32) {
    %c0_i32 = arith.constant 0 : i32
    %c0_i32_0 = arith.constant 0 : i32
    %c0_i32_1 = arith.constant 0 : i32
    return %c0_i32, %c0_i32_0 : i32, i32
  }
  func.func @transform_4(%arg0: i32) -> (i32, i32) {
    %c0_i32 = arith.constant 0 : i32
    %c0_i32_0 = arith.constant 0 : i32
    %c0_i32_1 = arith.constant 0 : i32
    return %c0_i32, %c0_i32_0 : i32, i32
  }
  func.func @transform_5(%arg0: i32) -> (i32, i32) {
    %c0_i32 = arith.constant 0 : i32
    %c0_i32_0 = arith.constant 0 : i32
    %c0_i32_1 = arith.constant 0 : i32
    return %c0_i32, %c0_i32_0 : i32, i32
  }
  func.func @transform_6(%arg0: i32) -> (i32, i32) {
    %c0_i32 = arith.constant 0 : i32
    %c0_i32_0 = arith.constant 0 : i32
    %c0_i32_1 = arith.constant 0 : i32
    return %c0_i32, %c0_i32_0 : i32, i32
  }
  func.func @transform_7(%arg0: i32) -> (i32, i32) {
    %c0_i32 = arith.constant 0 : i32
    %c0_i32_0 = arith.constant 0 : i32
    return %c0_i32, %arg0 : i32, i32
  }
}

</mosaic_0001>

<llo_original>
// kernel: tpu_custom_call.1
$region0: #{tpu_custom_call.1}
  #allocation0 [shape = 'u32[]', space=smem, size = 0x4, offset = 0x4, fixed_abs, tag = 'smem constant byte address 0x4 - core index']
  #allocation1 [shape = 'u32[144,128]{1,0:T(1,128)}', space=vmem, size = 0x12000, scoped, tag = 'internal scratch']
  %s0 = inlined_call_operand.vmem [shape: f32[8,16], index: 0, kind: input, shape index: {}]
  %s1 = inlined_call_operand.vmem [shape: bf16[64,16], index: 1, kind: input, shape index: {}]
  %s2 = inlined_call_operand.vmem [shape: f32[64,1], index: 2, kind: input, shape index: {}]
  %s3 = inlined_call_operand.vmem [shape: bf16[64,64], index: 3, kind: input, shape index: {}]
  %s4 = inlined_call_operand.vmem [shape: f32[64,1], index: 4, kind: input, shape index: {}]
  %s5 = inlined_call_operand.vmem [shape: bf16[9,64], index: 5, kind: input, shape index: {}]
  %s6 = inlined_call_operand.vmem [shape: f32[9,1], index: 6, kind: input, shape index: {}]
  %s7 = inlined_call_operand.hbm [shape: f32[8,8], index: 7, kind: output, shape index: {}]
  %s8 = sld [smem:[#allocation0]]
  $region38: #{tpu_custom_call.1} parent=0
    _
  %s10 = ssub.s32 1, %s8
  %s11 = scalar_select 0, %s10, %s8
  $region1: #{tpu_custom_call.1} parent=0
    #allocation2 [shape = 'u8[4096]{0}', space=vmem, size = 0x1000, scoped, tag = 'output window, operand 0, single buffered']
    #allocation3 [shape = 's32[1]{0}', space=sflag, size = 0x4, scoped, tag = 'scoped memory for tpu_custom_call.1']
    %12 = vsyncpa [#allocation3], 0
    // Predicated region
    $region2: #{tpu_custom_call.1} parent=1 // pred_check
      _
    $region3: #{tpu_custom_call.1} parent=1 // pred_check_branch
      %14 = sbr.rel (0) target = $region5
    $region4: #{tpu_custom_call.1} parent=1 // pred_region
      _
    $region5: #{tpu_custom_call.1} parent=1 // pred_fallthru
      _
    // Predicated region
    $region6: #{tpu_custom_call.1} parent=1 // pred_check
      _
    $region7: #{tpu_custom_call.1} parent=1 // pred_check_branch
      %16 = sbr.rel (0) target = $region9
    $region8: #{tpu_custom_call.1} parent=1 // pred_region
      _
    $region9: #{tpu_custom_call.1} parent=1 // pred_fallthru
      _
    // Predicated region
    $region10: #{tpu_custom_call.1} parent=1 // pred_check
      _
    $region11: #{tpu_custom_call.1} parent=1 // pred_check_branch
      %18 = sbr.rel (0) target = $region13
    $region12: #{tpu_custom_call.1} parent=1 // pred_region
      _
    $region13: #{tpu_custom_call.1} parent=1 // pred_fallthru
      _
    // Predicated region
    $region14: #{tpu_custom_call.1} parent=1 // pred_check
      _
    $region15: #{tpu_custom_call.1} parent=1 // pred_check_branch
      %20 = sbr.rel (0) target = $region17
    $region16: #{tpu_custom_call.1} parent=1 // pred_region
      _
    $region17: #{tpu_custom_call.1} parent=1 // pred_fallthru
      _
    // Predicated region
    $region18: #{tpu_custom_call.1} parent=1 // pred_check
      _
    $region19: #{tpu_custom_call.1} parent=1 // pred_check_branch
      %22 = sbr.rel (0) target = $region21
    $region20: #{tpu_custom_call.1} parent=1 // pred_region
      _
    $region21: #{tpu_custom_call.1} parent=1 // pred_fallthru
      _
    // Predicated region
    $region22: #{tpu_custom_call.1} parent=1 // pred_check
      _
    $region23: #{tpu_custom_call.1} parent=1 // pred_check_branch
      %24 = sbr.rel (0) target = $region25
    $region24: #{tpu_custom_call.1} parent=1 // pred_region
      _
    $region25: #{tpu_custom_call.1} parent=1 // pred_fallthru
      _
    // Predicated region
    $region26: #{tpu_custom_call.1} parent=1 // pred_check
      _
    $region27: #{tpu_custom_call.1} parent=1 // pred_check_branch
      %26 = sbr.rel (0) target = $region29
    $region28: #{tpu_custom_call.1} parent=1 // pred_region
      _
    $region29: #{tpu_custom_call.1} parent=1 // pred_fallthru
      _
    %v28 = vld [vmem:[%s0] sm:$0xff]
    %v29 = vpack.c.bf16 %v28, %v28
    %v30 = vld [vmem:[%s1] sm:$0xf]
    %v31 = vld [vmem:[%s1 + $0x4] sm:$0xf]
    %v32 = vld [vmem:[%s1 + $0x8] sm:$0xf]
    %v33 = vld [vmem:[%s1 + $0xc] sm:$0xf]
    %v34 = vld [vmem:[%s1 + $0x10] sm:$0xf]
    %v35 = vld [vmem:[%s1 + $0x14] sm:$0xf]
    %v36 = vld [vmem:[%s1 + $0x18] sm:$0xf]
    %v37 = vld [vmem:[%s1 + $0x1c] sm:$0xf]
    %v38 = vld [vmem:[%s2] sm:$0xff]
    %v39 = vld [vmem:[%s2 + $0x8] sm:$0xff]
    %v40 = vld [vmem:[%s2 + $0x10] sm:$0xff]
    %v41 = vld [vmem:[%s2 + $0x18] sm:$0xff]
    %v42 = vld [vmem:[%s2 + $0x20] sm:$0xff]
    %v43 = vld [vmem:[%s2 + $0x28] sm:$0xff]
    %v44 = vld [vmem:[%s2 + $0x30] sm:$0xff]
    %v45 = vld [vmem:[%s2 + $0x38] sm:$0xff]
    %47 = vset.pattern.permute.xlu0 0
    %48 = vperm.xlu0 %47, %v38
    %v49 = vpop.permute.xlu0 %48
    %52 = vset.pattern.permute.xlu0 0
    %53 = vperm.xlu0 %52, %v39
    %v54 = vpop.permute.xlu0 %53
    %57 = vset.pattern.permute.xlu0 0
    %58 = vperm.xlu0 %57, %v40
    %v59 = vpop.permute.xlu0 %58
    %62 = vset.pattern.permute.xlu0 0
    %63 = vperm.xlu0 %62, %v41
    %v64 = vpop.permute.xlu0 %63
    %67 = vset.pattern.permute.xlu0 0
    %68 = vperm.xlu0 %67, %v42
    %v69 = vpop.permute.xlu0 %68
    %72 = vset.pattern.permute.xlu0 0
    %73 = vperm.xlu0 %72, %v43
    %v74 = vpop.permute.xlu0 %73
    %77 = vset.pattern.permute.xlu0 0
    %78 = vperm.xlu0 %77, %v44
    %v79 = vpop.permute.xlu0 %78
    %82 = vset.pattern.permute.xlu0 0
    %83 = vperm.xlu0 %82, %v45
    %v84 = vpop.permute.xlu0 %83
    %v94 = vunpack.c.l.b16 %v30
    %v95 = vunpack.c.l.b16 %v31
    %v96 = vunpack.c.l.b16 %v32
    %v97 = vunpack.c.l.b16 %v33
    %v98 = vunpack.c.l.b16 %v34
    %v99 = vunpack.c.l.b16 %v35
    %v100 = vunpack.c.l.b16 %v36
    %v101 = vunpack.c.l.b16 %v37
    %v102 = vpack.c.b16 %v95, %v94
    %v103 = vpack.c.b16 %v97, %v96
    %v104 = vpack.c.b16 %v99, %v98
    %v105 = vpack.c.b16 %v101, %v100
    %vm106 = vcmask 130048
    %v108 = vsel %vm106, %v102, 0
    %v111 = vsel %vm106, %v103, 0
    %v114 = vsel %vm106, %v104, 0
    %v117 = vsel %vm106, %v105, 0
    %v120 = vsel %vm106, %v29, 0
    %122 = vmatprep.subr.bf16.mxu0 0
    %123 = vmatpush1.bf16.xpose.msra.mxu0 %v120
    %124 = vmatprep.subr.bf16.mxu0 0
    %125 = vmatpush1.bf16.xpose.msra.mxu0 0
    %126 = vmatprep.subr.bf16.mxu0 0
    %127 = vmatpush1.bf16.xpose.msra.mxu0 0
    %128 = vmatprep.subr.bf16.mxu0 0
    %129 = vmatpush1.bf16.xpose.msra.mxu0 0
    %130 = vmatprep.subr.bf16.mxu0 0
    %131 = vmatpush1.bf16.xpose.msra.mxu0 0
    %132 = vmatprep.subr.bf16.mxu0 0
    %133 = vmatpush1.bf16.xpose.msra.mxu0 0
    %134 = vmatprep.subr.bf16.mxu0 0
    %135 = vmatpush1.bf16.xpose.msra.mxu0 0
    %136 = vmatprep.subr.bf16.mxu0 0
    %137 = vmatpush1.bf16.xpose.msra.mxu0 0
    %138 = vmatprep.subr.bf16.mxu0 0
    %139 = vmatpush1.bf16.xpose.msra.mxu0 0
    %140 = vmatprep.subr.bf16.mxu0 0
    %141 = vmatpush1.bf16.xpose.msra.mxu0 0
    %142 = vmatprep.subr.bf16.mxu0 0
    %143 = vmatpush1.bf16.xpose.msra.mxu0 0
    %144 = vmatprep.subr.bf16.mxu0 0
    %145 = vmatpush1.bf16.xpose.msra.mxu0 0
    %146 = vmatprep.subr.bf16.mxu0 0
    %147 = vmatpush1.bf16.xpose.msra.mxu0 0
    %148 = vmatprep.subr.bf16.mxu0 0
    %149 = vmatpush1.bf16.xpose.msra.mxu0 0
    %150 = vmatprep.subr.bf16.mxu0 0
    %151 = vmatpush1.bf16.xpose.msra.mxu0 0
    %152 = vmatprep.subr.bf16.mxu0 0
    %153 = vmatpush1.bf16.xpose.msra.mxu0 0
    %154 = vmatprep.mubr.bf16.mxu0 0
    %155 = vmatmul.mubr.bf16.gmra.mrb[0].mxu0 %v108
    %v156 = vpop.f32.mrb[0].mxu0
    %v157 = vadd.f32 %v49, %v156
    %v158 = vpop.f32.mrb[0].mxu0
    %v159 = vpop.f32.mrb[0].mxu0
    %v160 = vadd.f32 %v54, %v159
    %v161 = vpop.f32.mrb[0].mxu0
    %162 = vmatprep.mubr.bf16.mxu0 0
    %163 = vmatmul.mubr.bf16.gmra.mrb[0].mxu0 %v111
    %v164 = vpop.f32.mrb[0].mxu0
    %v165 = vadd.f32 %v59, %v164
    %v166 = vpop.f32.mrb[0].mxu0
    %v167 = vpop.f32.mrb[0].mxu0
    %v168 = vadd.f32 %v64, %v167
    %v169 = vpop.f32.mrb[0].mxu0
    %170 = vmatprep.mubr.bf16.mxu0 0
    %171 = vmatmul.mubr.bf16.gmra.mrb[0].mxu0 %v114
    %v172 = vpop.f32.mrb[0].mxu0
    %v173 = vadd.f32 %v69, %v172
    %v174 = vpop.f32.mrb[0].mxu0
    %v175 = vpop.f32.mrb[0].mxu0
    %v176 = vadd.f32 %v74, %v175
    %v177 = vpop.f32.mrb[0].mxu0
    %178 = vmatprep.mubr.bf16.mxu0 0
    %179 = vmatmul.mubr.bf16.gmra.mrb[0].mxu0 %v117
    %v180 = vpop.f32.mrb[0].mxu0
    %v181 = vadd.f32 %v79, %v180
    %v182 = vpop.f32.mrb[0].mxu0
    %v183 = vpop.f32.mrb[0].mxu0
    %v184 = vadd.f32 %v84, %v183
    %v185 = vpop.f32.mrb[0].mxu0
    %186 = vdwg.mxu0
    %v187 = vtanh.pop %v157
    %v188 = vtanh.pop %v160
    %v189 = vtanh.pop %v165
    %v190 = vtanh.pop %v168
    %v191 = vtanh.pop %v173
    %v192 = vtanh.pop %v176
    %v193 = vtanh.pop %v181
    %v194 = vtanh.pop %v184
    %v195 = vld [vmem:[%s3] sm:$0xf]
    %v196 = vld [vmem:[%s3 + $0x4] sm:$0xf]
    %v197 = vld [vmem:[%s3 + $0x8] sm:$0xf]
    %v198 = vld [vmem:[%s3 + $0xc] sm:$0xf]
    %v199 = vld [vmem:[%s3 + $0x10] sm:$0xf]
    %v200 = vld [vmem:[%s3 + $0x14] sm:$0xf]
    %v201 = vld [vmem:[%s3 + $0x18] sm:$0xf]
    %v202 = vld [vmem:[%s3 + $0x1c] sm:$0xf]
    %v203 = vpack.c.bf16 %v188, %v187
    %v204 = vpack.c.bf16 %v190, %v189
    %v205 = vpack.c.bf16 %v192, %v191
    %v206 = vpack.c.bf16 %v194, %v193
    %v207 = vld [vmem:[%s4] sm:$0xff]
    %v208 = vld [vmem:[%s4 + $0x8] sm:$0xff]
    %v209 = vld [vmem:[%s4 + $0x10] sm:$0xff]
    %v210 = vld [vmem:[%s4 + $0x18] sm:$0xff]
    %v211 = vld [vmem:[%s4 + $0x20] sm:$0xff]
    %v212 = vld [vmem:[%s4 + $0x28] sm:$0xff]
    %v213 = vld [vmem:[%s4 + $0x30] sm:$0xff]
    %v214 = vld [vmem:[%s4 + $0x38] sm:$0xff]
    %216 = vset.pattern.permute.xlu0 0
    %217 = vperm.xlu0 %216, %v207
    %v218 = vpop.permute.xlu0 %217
    %221 = vset.pattern.permute.xlu0 0
    %222 = vperm.xlu0 %221, %v208
    %v223 = vpop.permute.xlu0 %222
    %226 = vset.pattern.permute.xlu0 0
    %227 = vperm.xlu0 %226, %v209
    %v228 = vpop.permute.xlu0 %227
    %231 = vset.pattern.permute.xlu0 0
    %232 = vperm.xlu0 %231, %v210
    %v233 = vpop.permute.xlu0 %232
    %236 = vset.pattern.permute.xlu0 0
    %237 = vperm.xlu0 %236, %v211
    %v238 = vpop.permute.xlu0 %237
    %241 = vset.pattern.permute.xlu0 0
    %242 = vperm.xlu0 %241, %v212
    %v243 = vpop.permute.xlu0 %242
    %246 = vset.pattern.permute.xlu0 0
    %247 = vperm.xlu0 %246, %v213
    %v248 = vpop.permute.xlu0 %247
    %251 = vset.pattern.permute.xlu0 0
    %252 = vperm.xlu0 %251, %v214
    %v253 = vpop.permute.xlu0 %252
    %v263 = vunpack.c.l.b16 %v195
    %v264 = vunpack.c.l.b16 %v196
    %v265 = vunpack.c.l.b16 %v197
    %v266 = vunpack.c.l.b16 %v198
    %v267 = vunpack.c.l.b16 %v199
    %v268 = vunpack.c.l.b16 %v200
    %v269 = vunpack.c.l.b16 %v201
    %v270 = vunpack.c.l.b16 %v202
    %v271 = vpack.c.b16 %v264, %v263
    %v272 = vpack.c.b16 %v266, %v265
    %v273 = vpack.c.b16 %v268, %v267
    %v274 = vpack.c.b16 %v270, %v269
    %vm275 = vcmask 523264
    %v277 = vsel %vm275, %v271, 0
    %v280 = vsel %vm275, %v272, 0
    %v283 = vsel %vm275, %v273, 0
    %v286 = vsel %vm275, %v274, 0
    %288 = vmatprep.subr.bf16.mxu0 0
    %289 = vmatpush1.bf16.msra.mxu0 %v203
    %290 = vmatprep.subr.bf16.mxu0 0
    %291 = vmatpush1.bf16.msra.mxu0 %v204
    %292 = vmatprep.subr.bf16.mxu0 0
    %293 = vmatpush1.bf16.msra.mxu0 %v205
    %294 = vmatprep.subr.bf16.mxu0 0
    %295 = vmatpush1.bf16.msra.mxu0 %v206
    %296 = vmatprep.subr.bf16.mxu0 0
    %297 = vmatpush1.bf16.msra.mxu0 0
    %298 = vmatprep.subr.bf16.mxu0 0
    %299 = vmatpush1.bf16.msra.mxu0 0
    %300 = vmatprep.subr.bf16.mxu0 0
    %301 = vmatpush1.bf16.msra.mxu0 0
    %302 = vmatprep.subr.bf16.mxu0 0
    %303 = vmatpush1.bf16.msra.mxu0 0
    %304 = vmatprep.subr.bf16.mxu0 0
    %305 = vmatpush1.bf16.msra.mxu0 0
    %306 = vmatprep.subr.bf16.mxu0 0
    %307 = vmatpush1.bf16.msra.mxu0 0
    %308 = vmatprep.subr.bf16.mxu0 0
    %309 = vmatpush1.bf16.msra.mxu0 0
    %310 = vmatprep.subr.bf16.mxu0 0
    %311 = vmatpush1.bf16.msra.mxu0 0
    %312 = vmatprep.subr.bf16.mxu0 0
    %313 = vmatpush1.bf16.msra.mxu0 0
    %314 = vmatprep.subr.bf16.mxu0 0
    %315 = vmatpush1.bf16.msra.mxu0 0
    %316 = vmatprep.subr.bf16.mxu0 0
    %317 = vmatpush1.bf16.msra.mxu0 0
    %318 = vmatprep.subr.bf16.mxu0 0
    %319 = vmatpush1.bf16.msra.mxu0 0
    %320 = vmatprep.mubr.bf16.mxu0 0
    %321 = vmatmul.mubr.bf16.gmra.mrb[0].mxu0 %v277
    %v322 = vpop.f32.mrb[0].mxu0
    %v323 = vadd.f32 %v218, %v322
    %v324 = vpop.f32.mrb[0].mxu0
    %v325 = vpop.f32.mrb[0].mxu0
    %v326 = vadd.f32 %v223, %v325
    %v327 = vpop.f32.mrb[0].mxu0
    %328 = vmatprep.mubr.bf16.mxu0 0
    %329 = vmatmul.mubr.bf16.gmra.mrb[0].mxu0 %v280
    %v330 = vpop.f32.mrb[0].mxu0
    %v331 = vadd.f32 %v228, %v330
    %v332 = vpop.f32.mrb[0].mxu0
    %v333 = vpop.f32.mrb[0].mxu0
    %v334 = vadd.f32 %v233, %v333
    %v335 = vpop.f32.mrb[0].mxu0
    %336 = vmatprep.mubr.bf16.mxu0 0
    %337 = vmatmul.mubr.bf16.gmra.mrb[0].mxu0 %v283
    %v338 = vpop.f32.mrb[0].mxu0
    %v339 = vadd.f32 %v238, %v338
    %v340 = vpop.f32.mrb[0].mxu0
    %v341 = vpop.f32.mrb[0].mxu0
    %v342 = vadd.f32 %v243, %v341
    %v343 = vpop.f32.mrb[0].mxu0
    %344 = vmatprep.mubr.bf16.mxu0 0
    %345 = vmatmul.mubr.bf16.gmra.mrb[0].mxu0 %v286
    %v346 = vpop.f32.mrb[0].mxu0
    %v347 = vadd.f32 %v248, %v346
    %v348 = vpop.f32.mrb[0].mxu0
    %v349 = vpop.f32.mrb[0].mxu0
    %v350 = vadd.f32 %v253, %v349
    %v351 = vpop.f32.mrb[0].mxu0
    %352 = vdwg.mxu0
    %v353 = vtanh.pop %v323
    %v354 = vtanh.pop %v326
    %v355 = vtanh.pop %v331
    %v356 = vtanh.pop %v334
    %v357 = vtanh.pop %v339
    %v358 = vtanh.pop %v342
    %v359 = vtanh.pop %v347
    %v360 = vtanh.pop %v350
    %v361 = vld [vmem:[%s5] sm:$0xf]
    %v362 = vld [vmem:[%s5 + $0x4] sm:$0x1]
    %v363 = vpack.c.bf16 %v354, %v353
    %v364 = vpack.c.bf16 %v356, %v355
    %v365 = vpack.c.bf16 %v358, %v357
    %v366 = vpack.c.bf16 %v360, %v359
    %v367 = vld [vmem:[%s6] sm:$0xff]
    %v368 = vld [vmem:[%s6 + $0x8] sm:$0x1]
    %370 = vset.pattern.permute.xlu0 0
    %371 = vperm.xlu0 %370, %v367
    %v372 = vpop.permute.xlu0 %371
    %375 = vset.pattern.permute.xlu0 0
    %376 = vperm.xlu0 %375, %v368
    %v377 = vpop.permute.xlu0 %376
    %v381 = vunpack.c.l.b16 %v361
    %v382 = vunpack.c.l.b16 %v362
    %v383 = vpack.c.b16 %v382, %v381
    %v385 = vsel %vm275, %v383, 0
    %387 = vmatprep.subr.bf16.mxu0 0
    %388 = vmatpush1.bf16.msra.mxu0 %v363
    %389 = vmatprep.subr.bf16.mxu0 0
    %390 = vmatpush1.bf16.msra.mxu0 %v364
    %391 = vmatprep.subr.bf16.mxu0 0
    %392 = vmatpush1.bf16.msra.mxu0 %v365
    %393 = vmatprep.subr.bf16.mxu0 0
    %394 = vmatpush1.bf16.msra.mxu0 %v366
    %395 = vmatprep.subr.bf16.mxu0 0
    %396 = vmatpush1.bf16.msra.mxu0 0
    %397 = vmatprep.subr.bf16.mxu0 0
    %398 = vmatpush1.bf16.msra.mxu0 0
    %399 = vmatprep.subr.bf16.mxu0 0
    %400 = vmatpush1.bf16.msra.mxu0 0
    %401 = vmatprep.subr.bf16.mxu0 0
    %402 = vmatpush1.bf16.msra.mxu0 0
    %403 = vmatprep.subr.bf16.mxu0 0
    %404 = vmatpush1.bf16.msra.mxu0 0
    %405 = vmatprep.subr.bf16.mxu0 0
    %406 = vmatpush1.bf16.msra.mxu0 0
    %407 = vmatprep.subr.bf16.mxu0 0
    %408 = vmatpush1.bf16.msra.mxu0 0
    %409 = vmatprep.subr.bf16.mxu0 0
    %410 = vmatpush1.bf16.msra.mxu0 0
    %411 = vmatprep.subr.bf16.mxu0 0
    %412 = vmatpush1.bf16.msra.mxu0 0
    %413 = vmatprep.subr.bf16.mxu0 0
    %414 = vmatpush1.bf16.msra.mxu0 0
    %415 = vmatprep.subr.bf16.mxu0 0
    %416 = vmatpush1.bf16.msra.mxu0 0
    %417 = vmatprep.subr.bf16.mxu0 0
    %418 = vmatpush1.bf16.msra.mxu0 0
    %419 = vmatprep.mubr.bf16.mxu0 0
    %420 = vmatmul.mubr.bf16.gmra.mrb[0].mxu0 %v385
    %v421 = vpop.f32.mrb[0].mxu0
    %v422 = vadd.f32 %v372, %v421
    %v423 = vpop.f32.mrb[0].mxu0
    %v424 = vpop.f32.mrb[0].mxu0
    %v425 = vadd.f32 %v377, %v424
    %v426 = vpop.f32.mrb[0].mxu0
    %427 = vdwg.mxu0
    %vm428 = vcmask 64512
    %v429 = vsel %vm428, %v422, -inf
    %vm430 = vcmask 57344
    %v431 = vsel %vm430, %v425, -inf
    %v432 = vmax.f32 %v429, %v431
    %v433 = vrot.slane %v432, 4
    %v434 = vmax.f32 %v432, %v433
    %v435 = vrot.slane %v434, 2
    %v436 = vmax.f32 %v434, %v435
    %v437 = vrot.slane %v436, 1
    %v438 = vmax.f32 %v436, %v437
    %v439 = vsub.f32 %v422, %v438
    %v440 = vsub.f32 %v425, %v438
    %v441 = vmul.f32 %v439, 1.442695
    %v442 = vpow.pop %v441
    %v443 = vmul.f32 %v440, 1.442695
    %v444 = vpow.pop %v443
    %v446 = vrot.slane %v442, 1
    %v448 = vadd.f32 %v442, %v446
    %v449 = vrot.slane %v442, 2
    %v451 = vadd.f32 %v448, %v449
    %v452 = vrot.slane %v442, 3
    %v454 = vadd.f32 %v451, %v452
    %v455 = vrot.slane %v442, 4
    %v457 = vadd.f32 %v454, %v455
    %v458 = vrot.slane %v442, 5
    %v460 = vadd.f32 %v457, %v458
    %v461 = vrot.slane %v442, 6
    %v463 = vadd.f32 %v460, %v461
    %v464 = vrot.slane %v442, 7
    %v466 = vadd.f32 %v463, %v464
    %v467 = vadd.f32 %v466, %v444
    %v469 = vrot.slane %v448, 7
    %v472 = vrot.slane %v451, 6
    %v475 = vrot.slane %v454, 5
    %v478 = vrot.slane %v457, 4
    %v481 = vrot.slane %v460, 3
    %v484 = vrot.slane %v463, 2
    %v487 = vrot.slane %v466, 1
    %vm489 = vcmask 1040384
    %v490 = vsel %vm489, %v442, %v469
    %vm491 = vcmask 1041408
    %v492 = vsel %vm491, %v490, %v472
    %vm493 = vcmask 1042432
    %v494 = vsel %vm493, %v492, %v475
    %vm495 = vcmask 1043456
    %v496 = vsel %vm495, %v494, %v478
    %vm497 = vcmask 1044480
    %v498 = vsel %vm497, %v496, %v481
    %vm499 = vcmask 1045504
    %v500 = vsel %vm499, %v498, %v484
    %vm501 = vcmask 1046528
    %v502 = vsel %vm501, %v500, %v487
    %v503 = vrcp.pop %v467
    %v504 = vlaneseq
    %v505 = vshrl.u32 %v504, 7
    %v506 = vsub.s32 0, %v505
    %v507 = vrot.slane %v503, %v506
    %v508 = vmul.f32 %v502, %v507
    %509 = vst.msk [vmem:[#allocation2] sm:$0xff] %vm428, %v508
    // Predicated region
    $region30: #{tpu_custom_call.1} parent=1 // pred_check
      _
    $region31: #{tpu_custom_call.1} parent=1 // pred_check_branch
      %511 = sbr.rel (0) target = $region33
    $region32: #{tpu_custom_call.1} parent=1 // pred_region
      %s513 = ssub.s32 128, 128
      %514 = vsyncadd [#allocation3], %s513
      %s516 = sshll.u32 [#allocation2], 4
      %s517 = int_to_ptr.vmem [resolvable:$true] %s516
      %519 = dma.vmem_to_hbm [thread:$0]  %s517, 128, %s7, [#allocation3]
    $region33: #{tpu_custom_call.1} parent=1 // pred_fallthru
      _
    // Predicated region
    $region34: #{tpu_custom_call.1} parent=1 // pred_check
      _
    $region35: #{tpu_custom_call.1} parent=1 // pred_check_branch
      %521 = sbr.rel (0) target = $region37
    $region36: #{tpu_custom_call.1} parent=1 // pred_region
      %522 = dma.done [#allocation3], 128
    $region37: #{tpu_custom_call.1} parent=1 // pred_fallthru
      _
    %523 = vsyncpa [#allocation3], 1

</llo_original>
